<compile_context>
chip_gen: v6e
topology: v6e:2x2x1
jax: 0.10.0
libtpu: 0.0.40
codegen_flags: <defaults>
</compile_context>

<pallas_src>
import functools

import numpy as np

import jax
import jax.numpy as jnp
from jax.experimental import pallas as pl
from jax.experimental.pallas import tpu as pltpu


def _make_conv_bn_relu_kernel(*, KH, KW, H, W, CIN, CIN_PAD, FPAD, dilation,
                              padding, relu, ipb):
    """Fused conv+BN+ReLU kernel: `ipb` images per grid step, stride-1 'same' conv."""
    HW = H * W
    HWT = ipb * HW

    def kernel(x_ref, w_ref, m_ref, s_ref, o_ref, slab_ref):
        # x_ref:    (ipb, CIN, HW)          f32   flattened-NCHW activations
        # w_ref:    (Cout, KH*KW*CIN_PAD)   bf16  BN-scale-folded weights
        # m_ref:    (KH*KW*CIN_PAD, HWT)    f32   0/1 validity mask (pad / wrap)
        # s_ref:    (Cout, 1)               f32   BN shift (+ folded conv bias)
        # o_ref:    (ipb, Cout, HW)         f32   flattened-NCHW output
        # slab_ref: (CIN_PAD, 2*FPAD + HWT) f32   zero-padded flat activation slab

        # Zero the slab (covers the flat-pad halo and the CIN..CIN_PAD-1 rows),
        # then drop each image's (CIN, HW) plane at a 128-aligned lane offset.
        slab_ref[...] = jnp.zeros_like(slab_ref)
        for i in range(ipb):
            slab_ref[pl.ds(0, CIN), pl.ds(FPAD + i * HW, HW)] = x_ref[i]

        # im2col: each tap is a lane-shifted window of the slab.  Pieces are
        # (CIN_PAD, HWT) -- whole f32 sublane tiles -- so the K-axis
        # concatenation is tile-aligned.
        pieces = []
        for kh in range(KH):
            for kw in range(KW):
                sh = (kh * dilation - padding) * W + (kw * dilation - padding)
                pieces.append(slab_ref[:, pl.ds(FPAD + sh, HWT)])
        patch = jnp.concatenate(pieces, axis=0)             # (K, HWT) f32
        patch = (patch * m_ref[...]).astype(jnp.bfloat16)   # mask pad/wrap lanes

        # One MXU contraction over all taps and channels, f32 accumulation.
        acc = jnp.dot(w_ref[...], patch,
                      preferred_element_type=jnp.float32)   # (Cout, HWT)

        y = acc + s_ref[...]            # per-channel shift, broadcast over lanes
        if relu:
            y = jnp.maximum(y, 0.0)
        y = y.astype(o_ref.dtype)
        for i in range(ipb):            # lane offsets are multiples of HW: aligned
            o_ref[i] = y[:, i * HW:(i + 1) * HW]

    return kernel


def basic_conv_forward(x_nchw, weight, gamma=None, beta=None,
                       running_mean=None, running_var=None, *,
                       stride=1, padding=0, dilation=1, groups=1, eps=1e-5,
                       relu=True, bn=True, bias=None, images_per_block=1):
    """BasicConv forward.  x_nchw: [N, Cin, H, W]; weight: [Cout, Cin, KH, KW].

    images_per_block=1 keeps a batch-wide "parallel" grid axis (both v7x TCs
    busy); images_per_block=N folds the batch into a single grid step (best on
    single-TensorCore v5e/v6e).
    """
    if groups != 1:
        raise NotImplementedError("groups > 1 not implemented")  # TODO(synk)

    N, Cin, H, W = x_nchw.shape
    Cout, _, KH, KW = weight.shape
    OH = (H + 2 * padding - dilation * (KH - 1) - 1) // stride + 1
    OW = (W + 2 * padding - dilation * (KW - 1) - 1) // stride + 1
    if stride != 1 or (OH, OW) != (H, W):
        # TODO(synk): strided / non-"same" convolutions need a windowed path.
        raise NotImplementedError("only stride-1 'same' convolutions supported")
    if N % images_per_block != 0:
        raise ValueError("N must be divisible by images_per_block")

    HW = H * W
    ipb = images_per_block
    HWT = ipb * HW
    CIN_PAD = ((Cin + 7) // 8) * 8          # sublane-tile aligned patch pieces
    K = KH * KW * CIN_PAD

    # Flat-pad halo for the lane-shifted windows; rounded to 128 so the slab
    # writes land on aligned lane offsets (loads are shifted, which is fine).
    shifts = [(kh * dilation - padding) * W + (kw * dilation - padding)
              for kh in range(KH) for kw in range(KW)]
    max_abs = max((abs(s) for s in shifts), default=0)
    FPAD = 0 if max_abs == 0 else ((max_abs + 127) // 128) * 128
    LP = 2 * FPAD + HWT

    # --- fold BatchNorm (eval-mode running stats) + bias into weight/shift ---
    if bn:
        scale = gamma * jax.lax.rsqrt(running_var + eps)
        shift = beta - running_mean * scale
    else:
        scale = jnp.ones((Cout,), jnp.float32)
        shift = jnp.zeros((Cout,), jnp.float32)
    if bias is not None:
        shift = shift + bias * scale

    # weight [Cout, Cin, KH, KW] -> [Cout, (kh, kw, c_pad)] bf16, scale folded.
    w = jnp.transpose(weight * scale[:, None, None, None], (0, 2, 3, 1))
    w = jnp.pad(w, ((0, 0), (0, 0), (0, 0), (0, CIN_PAD - Cin)))
    w_mat = w.reshape(Cout, K).astype(jnp.bfloat16)
    shift2d = shift.reshape(Cout, 1).astype(jnp.float32)

    # 0/1 validity mask (trace-time numpy constant): kills lanes whose source
    # pixel falls in the spatial zero-padding or wraps across a row / image.
    p = np.arange(HW)
    oh, ow = p // W, p % W
    rows = []
    for kh in range(KH):
        for kw in range(KW):
            dh, dw = kh * dilation - padding, kw * dilation - padding
            m = ((oh + dh >= 0) & (oh + dh < H) &
                 (ow + dw >= 0) & (ow + dw < W)).astype(np.float32)
            rows.append(np.broadcast_to(np.tile(m, ipb), (CIN_PAD, HWT)))
    mask = jnp.asarray(np.concatenate(rows, axis=0))        # (K, HWT)

    x_flat = x_nchw.reshape(N, Cin, HW)                     # free: contiguous

    kernel = _make_conv_bn_relu_kernel(
        KH=KH, KW=KW, H=H, W=W, CIN=Cin, CIN_PAD=CIN_PAD, FPAD=FPAD,
        dilation=dilation, padding=padding, relu=relu, ipb=ipb)

    out = pl.pallas_call(
        kernel,
        out_shape=jax.ShapeDtypeStruct((N, Cout, HW), jnp.float32),
        grid_spec=pltpu.PrefetchScalarGridSpec(
            num_scalar_prefetch=0,
            grid=(N // ipb,),
            in_specs=[
                pl.BlockSpec((ipb, Cin, HW), lambda n: (n, 0, 0)),
                pl.BlockSpec((Cout, K), lambda n: (0, 0)),
                pl.BlockSpec((K, HWT), lambda n: (0, 0)),
                pl.BlockSpec((Cout, 1), lambda n: (0, 0)),
            ],
            out_specs=pl.BlockSpec((ipb, Cout, HW), lambda n: (n, 0, 0)),
            scratch_shapes=[pltpu.VMEM((CIN_PAD, LP), jnp.float32)],
        ),
        compiler_params=pltpu.CompilerParams(
            dimension_semantics=("parallel",),
            # Blocks total a few hundred KiB even double-buffered; 32 MiB is a
            # generation-safe explicit scoped limit (v7x physical is 64 MiB).
            vmem_limit_bytes=32 * 1024 * 1024),
    )(x_flat, w_mat, mask, shift2d)

    return out.reshape(N, Cout, OH, OW)                     # free: contiguous


def _reference_forward(x_nchw, weight, gamma=None, beta=None,
                       running_mean=None, running_var=None, *,
                       stride=1, padding=0, dilation=1, eps=1e-5,
                       relu=True, bn=True, bias=None):
    """Pure-JAX reference using the same bf16-rounded, BN-folded operands."""
    Cout = weight.shape[0]
    if bn:
        scale = gamma * jax.lax.rsqrt(running_var + eps)
        shift = beta - running_mean * scale
    else:
        scale = jnp.ones((Cout,), jnp.float32)
        shift = jnp.zeros((Cout,), jnp.float32)
    if bias is not None:
        shift = shift + bias * scale
    wf = (weight * scale[:, None, None, None]).astype(jnp.bfloat16).astype(jnp.float32)
    xb = x_nchw.astype(jnp.bfloat16).astype(jnp.float32)
    y = jax.lax.conv_general_dilated(
        xb, wf, window_strides=(stride, stride),
        padding=[(padding, padding), (padding, padding)],
        rhs_dilation=(dilation, dilation),
        dimension_numbers=("NCHW", "OIHW", "NCHW"),
        precision=jax.lax.Precision.HIGHEST)
    y = y + shift[None, :, None, None]
    if relu:
        y = jnp.maximum(y, 0.0)
    return y


if __name__ == "__main__":
    # BasicConv(in_planes=4, out_planes=8, kernel_size=3, stride=1, padding=1)
    N, Cin, H, W = 2, 4, 16, 16
    Cout, KH, KW = 8, 3, 3
    stride, padding = 1, 1

    key = jax.random.PRNGKey(0)
    kx, kw_, kg, kb, km, kv = jax.random.split(key, 6)
    x = jax.random.normal(kx, (N, Cin, H, W), dtype=jnp.float32)
    weight = jax.random.normal(kw_, (Cout, Cin, KH, KW), dtype=jnp.float32) * 0.1
    gamma = 1.0 + 0.05 * jax.random.normal(kg, (Cout,), dtype=jnp.float32)
    beta = 0.05 * jax.random.normal(kb, (Cout,), dtype=jnp.float32)
    running_mean = 0.1 * jax.random.normal(km, (Cout,), dtype=jnp.float32)
    running_var = jnp.abs(1.0 + 0.1 * jax.random.normal(kv, (Cout,), dtype=jnp.float32))

    y_ref = _reference_forward(x, weight, gamma, beta, running_mean, running_var,
                               stride=stride, padding=padding, eps=1e-5,
                               relu=True, bn=True)

    # images_per_block=1: 2-wide "parallel" grid (keeps both v7x TCs busy).
    # images_per_block=N: single grid step (single-TC v5e/v6e sweet spot).
    for ipb in (1, N):
        fwd = jax.jit(functools.partial(
            basic_conv_forward, stride=stride, padding=padding, eps=1e-5,
            relu=True, bn=True, images_per_block=ipb))
        y = fwd(x, weight, gamma, beta, running_mean, running_var)
        jax.block_until_ready(y)

        assert y.shape == (N, Cout, H, W), y.shape
        assert bool(jnp.all(y >= 0.0))  # ReLU applied
        err = float(jnp.max(jnp.abs(y - y_ref)))
        assert err < 1e-2, (ipb, err)

    print("KERNEL_OK")
</pallas_src>

<mosaic_0001>
module attributes {stable_mosaic.version = 11 : i64} {
  func.func @kernel(%arg0: i32, %arg1: memref<1x4x256xf32, #tpu.memory_space<vmem>>, %arg2: memref<8x72xbf16, #tpu.memory_space<vmem>>, %arg3: memref<72x256xf32, #tpu.memory_space<vmem>>, %arg4: memref<8x1xf32, #tpu.memory_space<vmem>>, %arg5: memref<1x8x256xf32, #tpu.memory_space<vmem>>, %arg6: memref<8x512xf32, #tpu.memory_space<vmem>>) attributes {dimension_semantics = [#tpu.dimension_semantics<parallel>], iteration_bounds = array<i64: 2>, scalar_prefetch = 0 : i64, scratch_operands = 1 : i64, tpu.core_type = #tpu.core_type<tc>, window_params = [{transform_indices = @transform_0, window_bounds = array<i64: 1, 4, 256>}, {pipeline_mode = #tpu.pipeline_mode<synchronous>, transform_indices = @transform_1, window_bounds = array<i64: 8, 72>}, {pipeline_mode = #tpu.pipeline_mode<synchronous>, transform_indices = @transform_2, window_bounds = array<i64: 72, 256>}, {pipeline_mode = #tpu.pipeline_mode<synchronous>, transform_indices = @transform_3, window_bounds = array<i64: 8, 1>}, {transform_indices = @transform_4, window_bounds = array<i64: 1, 8, 256>}]} {
    %cst = arith.constant 0.000000e+00 : f32
    %0 = vector.broadcast %cst : f32 to vector<8x512xf32>
    %c0 = arith.constant 0 : index
    %c0_0 = arith.constant 0 : index
    %1 = vector.load %arg6[%c0, %c0_0] : memref<8x512xf32, #tpu.memory_space<vmem>>, vector<8x512xf32>
    tpu.vector_store %arg6[%c0, %c0_0], %0 {strides = array<i32>} : memref<8x512xf32, #tpu.memory_space<vmem>>, vector<8x512xf32>,
    %c0_1 = arith.constant 0 : index
    %c0_2 = arith.constant 0 : index
    %c0_3 = arith.constant 0 : index
    %2 = vector.load %arg1[%c0_1, %c0_2, %c0_3] : memref<1x4x256xf32, #tpu.memory_space<vmem>>, vector<1x4x256xf32>
    %3 = vector.shape_cast %2 : vector<1x4x256xf32> to vector<4x256xf32>
    %c0_4 = arith.constant 0 : index
    %c128 = arith.constant 128 : index
    %4 = vector.load %arg6[%c0_4, %c128] : memref<8x512xf32, #tpu.memory_space<vmem>>, vector<4x256xf32>
    tpu.vector_store %arg6[%c0_4, %c128], %3 {strides = array<i32>} : memref<8x512xf32, #tpu.memory_space<vmem>>, vector<4x256xf32>,
    %c0_5 = arith.constant 0 : index
    %c111 = arith.constant 111 : index
    %5 = vector.load %arg6[%c0_5, %c111] : memref<8x512xf32, #tpu.memory_space<vmem>>, vector<8x256xf32>
    %c0_6 = arith.constant 0 : index
    %c112 = arith.constant 112 : index
    %6 = vector.load %arg6[%c0_6, %c112] : memref<8x512xf32, #tpu.memory_space<vmem>>, vector<8x256xf32>
    %c0_7 = arith.constant 0 : index
    %c113 = arith.constant 113 : index
    %7 = vector.load %arg6[%c0_7, %c113] : memref<8x512xf32, #tpu.memory_space<vmem>>, vector<8x256xf32>
    %c0_8 = arith.constant 0 : index
    %c127 = arith.constant 127 : index
    %8 = vector.load %arg6[%c0_8, %c127] : memref<8x512xf32, #tpu.memory_space<vmem>>, vector<8x256xf32>
    %c0_9 = arith.constant 0 : index
    %c128_10 = arith.constant 128 : index
    %9 = vector.load %arg6[%c0_9, %c128_10] : memref<8x512xf32, #tpu.memory_space<vmem>>, vector<8x256xf32>
    %c0_11 = arith.constant 0 : index
    %c129 = arith.constant 129 : index
    %10 = vector.load %arg6[%c0_11, %c129] : memref<8x512xf32, #tpu.memory_space<vmem>>, vector<8x256xf32>
    %c0_12 = arith.constant 0 : index
    %c143 = arith.constant 143 : index
    %11 = vector.load %arg6[%c0_12, %c143] : memref<8x512xf32, #tpu.memory_space<vmem>>, vector<8x256xf32>
    %c0_13 = arith.constant 0 : index
    %c144 = arith.constant 144 : index
    %12 = vector.load %arg6[%c0_13, %c144] : memref<8x512xf32, #tpu.memory_space<vmem>>, vector<8x256xf32>
    %c0_14 = arith.constant 0 : index
    %c145 = arith.constant 145 : index
    %13 = vector.load %arg6[%c0_14, %c145] : memref<8x512xf32, #tpu.memory_space<vmem>>, vector<8x256xf32>
    %14 = tpu.concatenate %5, %6, %7, %8, %9, %10, %11, %12, %13 in 0 : vector<8x256xf32>, vector<8x256xf32>, vector<8x256xf32>, vector<8x256xf32>, vector<8x256xf32>, vector<8x256xf32>, vector<8x256xf32>, vector<8x256xf32>, vector<8x256xf32> -> vector<72x256xf32>
    %c0_15 = arith.constant 0 : index
    %c0_16 = arith.constant 0 : index
    %15 = vector.load %arg3[%c0_15, %c0_16] : memref<72x256xf32, #tpu.memory_space<vmem>>, vector<72x256xf32>
    %16 = arith.mulf %14, %15 : vector<72x256xf32>
    %17 = arith.truncf %16 : vector<72x256xf32> to vector<72x256xbf16>
    %c0_17 = arith.constant 0 : index
    %c0_18 = arith.constant 0 : index
    %18 = vector.load %arg2[%c0_17, %c0_18] : memref<8x72xbf16, #tpu.memory_space<vmem>>, vector<8x72xbf16>
    %cst_19 = arith.constant dense<0.000000e+00> : vector<8x256xf32>
    %19 = tpu.matmul %18, %17, %cst_19 {dimension_numbers = #tpu.dot_dimension_numbers<[1], [0], [0], [1], [0, 0, 1, 1], [], []>} : vector<8x72xbf16>, vector<72x256xbf16>, vector<8x256xf32> -> vector<8x256xf32>
    %c0_20 = arith.constant 0 : index
    %c0_21 = arith.constant 0 : index
    %20 = vector.load %arg4[%c0_20, %c0_21] : memref<8x1xf32, #tpu.memory_space<vmem>>, vector<8x1xf32>
    %21 = vector.broadcast %20 : vector<8x1xf32> to vector<8x256xf32>
    %22 = arith.addf %19, %21 : vector<8x256xf32>
    %cst_22 = arith.constant 0.000000e+00 : f32
    %23 = vector.broadcast %cst_22 : f32 to vector<8x256xf32>
    %24 = arith.maximumf %22, %23 : vector<8x256xf32>
    %c0_23 = arith.constant 0 : index
    %c0_24 = arith.constant 0 : index
    %c0_25 = arith.constant 0 : index
    %25 = vector.load %arg5[%c0_23, %c0_24, %c0_25] : memref<1x8x256xf32, #tpu.memory_space<vmem>>, vector<1x8x256xf32>
    %26 = vector.shape_cast %25 : vector<1x8x256xf32> to vector<8x256xf32>
    %27 = vector.shape_cast %24 : vector<8x256xf32> to vector<1x8x256xf32>
    tpu.vector_store %arg5[%c0_23, %c0_24, %c0_25], %27 {strides = array<i32>} : memref<1x8x256xf32, #tpu.memory_space<vmem>>, vector<1x8x256xf32>,
    return
  }
  func.func @transform_0(%arg0: i32) -> (i32, i32, i32) {
    %c0_i32 = arith.constant 0 : i32
    %c0_i32_0 = arith.constant 0 : i32
    %c0_i32_1 = arith.constant 0 : i32
    return %arg0, %c0_i32, %c0_i32_0 : i32, i32, i32
  }
  func.func @transform_1(%arg0: i32) -> (i32, i32) {
    %c0_i32 = arith.constant 0 : i32
    %c0_i32_0 = arith.constant 0 : i32
    %c0_i32_1 = arith.constant 0 : i32
    return %c0_i32, %c0_i32_0 : i32, i32
  }
  func.func @transform_2(%arg0: i32) -> (i32, i32) {
    %c0_i32 = arith.constant 0 : i32
    %c0_i32_0 = arith.constant 0 : i32
    %c0_i32_1 = arith.constant 0 : i32
    return %c0_i32, %c0_i32_0 : i32, i32
  }
  func.func @transform_3(%arg0: i32) -> (i32, i32) {
    %c0_i32 = arith.constant 0 : i32
    %c0_i32_0 = arith.constant 0 : i32
    %c0_i32_1 = arith.constant 0 : i32
    return %c0_i32, %c0_i32_0 : i32, i32
  }
  func.func @transform_4(%arg0: i32) -> (i32, i32, i32) {
    %c0_i32 = arith.constant 0 : i32
    %c0_i32_0 = arith.constant 0 : i32
    %c0_i32_1 = arith.constant 0 : i32
    return %arg0, %c0_i32, %c0_i32_0 : i32, i32, i32
  }
}

</mosaic_0001>

<llo_original>
// kernel: basic_conv_forward.1
$region0: #{basic_conv_forward.1}
  #allocation0 [shape = 'u32[]', space=smem, size = 0x4, offset = 0x4, fixed_abs, tag = 'smem constant byte address 0x4 - core index']
  #allocation1 [shape = 'u32[144,128]{1,0:T(1,128)}', space=vmem, size = 0x12000, scoped, tag = 'internal scratch']
  #allocation2 [shape = 'f32[8,512]{1,0:T(8,128)}', space=vmem, size = 0x4000, scoped, tag = 'scratch operand']
  %s0 = inlined_call_operand.vmem [shape: f32[2,4,256], index: 0, kind: input, shape index: {}]
  %s1 = inlined_call_operand.vmem [shape: bf16[8,72], index: 1, kind: input, shape index: {}]
  %s2 = inlined_call_operand.vmem [shape: f32[72,256], index: 2, kind: input, shape index: {}]
  %s3 = inlined_call_operand.vmem [shape: f32[8,1], index: 3, kind: input, shape index: {}]
  %s4 = inlined_call_operand.vmem [shape: f32[2,8,256], index: 4, kind: output, shape index: {}]
  %s5 = sld [smem:[#allocation0]]
  $region49: #{basic_conv_forward.1} parent=0
    _
  %s7 = ssub.s32 1, %s5
  %s8 = scalar_select 0, %s7, %s5
  loop: start=0, step=1, limit=4
  $region2: #{basic_conv_forward.1} parent=0 // loop_pre_header
    _
  $region3: #{basic_conv_forward.1} parent=0 // loop_header
    %s10 = sphi 0, %s14
    %p11 = scmp.ge.s32.totalorder %s10, 4
    %s20 = sphi 0, %s22
    %s23 = sphi 0, %s20
    %s24 = sphi 0, %s23
    %s40 = sphi 0, %s24
    %s44 = sphi 0, %s44
    %s46 = sphi 0, %s44
    %s47 = sphi 0, %s46
    %s61 = sphi 0, %s47
    %s65 = sphi 0, %s65
    %s67 = sphi 0, %s65
    %s68 = sphi 0, %s67
    %s82 = sphi 0, %s68
    %s86 = sphi 0, %s86
    %s88 = sphi 0, %s86
    %s89 = sphi 0, %s88
    %s103 = sphi 0, %s89
    %s109 = sphi 0, %s111
    %s112 = sphi 0, %s109
    %s113 = sphi 0, %s112
    %s129 = sphi 0, %s113
  $region4: #{basic_conv_forward.1} parent=0 // loop_header_branch
    %13 = sbr.rel (%p11) target = $region8
  $region5: #{basic_conv_forward.1} parent=0 // loop_body
    %s15 = ssub.s32 %s10, 1
    %s16 = ssub.s32 %s10, 2
    %s17 = sadd.s32 %s10, 1
    %s18 = ssub.s32 %s10, %s17
    %p19 = scmp.eq.s32.totalorder %s18, 0
    %s21 = sadd.s32 %s20, 1
    %s22 = scalar_select %p19, %s20, %s21
    %p25 = pneg %p19
    %p26 = scmp.eq.s32.totalorder %s10, 1
    %p27 = por %p25, %p26
    %p28 = scmp.ne.s32.totalorder %s20, %s23
    %p29 = scmp.eq.s32.totalorder %s10, 0
    %p30 = por %p28, %p29
    %p31 = scmp.ne.s32.totalorder %s20, %s23
    %p32 = scmp.eq.s32.totalorder %s15, 1
    %p33 = por %p31, %p32
    %p34 = scmp.ne.s32.totalorder %s23, %s24
    %p35 = scmp.eq.s32.totalorder %s15, 0
    %p36 = por %p34, %p35
    %p37 = scmp.ne.s32.totalorder %s23, %s24
    %p38 = scmp.eq.s32.totalorder %s16, 1
    %p39 = por %p37, %p38
    %p41 = scmp.ne.s32.totalorder %s24, %s40
    %p42 = scmp.eq.s32.totalorder %s16, 0
    %p43 = por %p41, %p42
    %s45 = sadd.s32 %s44, 1
    %p48 = scmp.eq.s32.totalorder %s10, 1
    %p49 = scmp.ne.s32.totalorder %s44, %s46
    %p50 = scmp.eq.s32.totalorder %s10, 0
    %p51 = por %p49, %p50
    %p52 = scmp.ne.s32.totalorder %s44, %s46
    %p53 = scmp.eq.s32.totalorder %s15, 1
    %p54 = por %p52, %p53
    %p55 = scmp.ne.s32.totalorder %s46, %s47
    %p56 = scmp.eq.s32.totalorder %s15, 0
    %p57 = por %p55, %p56
    %p58 = scmp.ne.s32.totalorder %s46, %s47
    %p59 = scmp.eq.s32.totalorder %s16, 1
    %p60 = por %p58, %p59
    %p62 = scmp.ne.s32.totalorder %s47, %s61
    %p63 = scmp.eq.s32.totalorder %s16, 0
    %p64 = por %p62, %p63
    %s66 = sadd.s32 %s65, 1
    %p69 = scmp.eq.s32.totalorder %s10, 1
    %p70 = scmp.ne.s32.totalorder %s65, %s67
    %p71 = scmp.eq.s32.totalorder %s10, 0
    %p72 = por %p70, %p71
    %p73 = scmp.ne.s32.totalorder %s65, %s67
    %p74 = scmp.eq.s32.totalorder %s15, 1
    %p75 = por %p73, %p74
    %p76 = scmp.ne.s32.totalorder %s67, %s68
    %p77 = scmp.eq.s32.totalorder %s15, 0
    %p78 = por %p76, %p77
    %p79 = scmp.ne.s32.totalorder %s67, %s68
    %p80 = scmp.eq.s32.totalorder %s16, 1
    %p81 = por %p79, %p80
    %p83 = scmp.ne.s32.totalorder %s68, %s82
    %p84 = scmp.eq.s32.totalorder %s16, 0
    %p85 = por %p83, %p84
    %s87 = sadd.s32 %s86, 1
    %p90 = scmp.eq.s32.totalorder %s10, 1
    %p91 = scmp.ne.s32.totalorder %s86, %s88
    %p92 = scmp.eq.s32.totalorder %s10, 0
    %p93 = por %p91, %p92
    %p94 = scmp.ne.s32.totalorder %s86, %s88
    %p95 = scmp.eq.s32.totalorder %s15, 1
    %p96 = por %p94, %p95
    %p97 = scmp.ne.s32.totalorder %s88, %s89
    %p98 = scmp.eq.s32.totalorder %s15, 0
    %p99 = por %p97, %p98
    %p100 = scmp.ne.s32.totalorder %s88, %s89
    %p101 = scmp.eq.s32.totalorder %s16, 1
    %p102 = por %p100, %p101
    %p104 = scmp.ne.s32.totalorder %s89, %s103
    %p105 = scmp.eq.s32.totalorder %s16, 0
    %p106 = por %p104, %p105
    %s107 = ssub.s32 %s10, %s17
    %p108 = scmp.eq.s32.totalorder %s107, 0
    %s110 = sadd.s32 %s109, 1
    %s111 = scalar_select %p108, %s109, %s110
    %p114 = pneg %p108
    %p115 = scmp.eq.s32.totalorder %s10, 1
    %p116 = por %p114, %p115
    %p117 = scmp.ne.s32.totalorder %s109, %s112
    %p118 = scmp.eq.s32.totalorder %s10, 0
    %p119 = por %p117, %p118
    %p120 = scmp.ne.s32.totalorder %s109, %s112
    %p121 = scmp.eq.s32.totalorder %s15, 1
    %p122 = por %p120, %p121
    %p123 = scmp.ne.s32.totalorder %s112, %s113
    %p124 = scmp.eq.s32.totalorder %s15, 0
    %p125 = por %p123, %p124
    %p126 = scmp.ne.s32.totalorder %s112, %s113
    %p127 = scmp.eq.s32.totalorder %s16, 1
    %p128 = por %p126, %p127
    %p130 = scmp.ne.s32.totalorder %s113, %s129
    %p131 = scmp.eq.s32.totalorder %s16, 0
    %p132 = por %p130, %p131
    %p133 = scmp.le.s32.totalorder 1, %s10
    %p134 = scmp.lt.s32.totalorder %s10, 3
    %p135 = pnand %p133, %p134
    %p136 = pneg %p135
    // Predicated region
    $region9: #{basic_conv_forward.1} parent=5 // pred_check
      _
    $region10: #{basic_conv_forward.1} parent=5 // pred_check_branch
      %138 = sbr.rel (%p135) target = $region12
    $region11: #{basic_conv_forward.1} parent=5 // pred_region
      %s139 = ssub.s32 %s10, 1
      // Predicated region
      $region13: #{basic_conv_forward.1} parent=11 // pred_check
        %p140 = pneg %p57
      $region14: #{basic_conv_forward.1} parent=11 // pred_check_branch
        %142 = sbr.rel (%p140) target = $region16
      $region15: #{basic_conv_forward.1} parent=11 // pred_region
        _
      $region16: #{basic_conv_forward.1} parent=11 // pred_fallthru
        _
      // Predicated region
      $region17: #{basic_conv_forward.1} parent=11 // pred_check
        %p143 = pneg %p78
      $region18: #{basic_conv_forward.1} parent=11 // pred_check_branch
        %145 = sbr.rel (%p143) target = $region20
      $region19: #{basic_conv_forward.1} parent=11 // pred_region
        _
      $region20: #{basic_conv_forward.1} parent=11 // pred_fallthru
        _
      // Predicated region
      $region21: #{basic_conv_forward.1} parent=11 // pred_check
        %p146 = pneg %p99
      $region22: #{basic_conv_forward.1} parent=11 // pred_check_branch
        %148 = sbr.rel (%p146) target = $region24
      $region23: #{basic_conv_forward.1} parent=11 // pred_region
        _
      $region24: #{basic_conv_forward.1} parent=11 // pred_fallthru
        _
    $region12: #{basic_conv_forward.1} parent=5 // pred_fallthru
      _
    %p149 = scmp.lt.s32.totalorder %s10, 2
    // Predicated region
    $region25: #{basic_conv_forward.1} parent=5 // pred_check
      %p150 = pneg %p149
    $region26: #{basic_conv_forward.1} parent=5 // pred_check_branch
      %152 = sbr.rel (%p150) target = $region28
    $region27: #{basic_conv_forward.1} parent=5 // pred_region
      // Predicated region
      $region29: #{basic_conv_forward.1} parent=27 // pred_check
        %p153 = pneg %p30
      $region30: #{basic_conv_forward.1} parent=27 // pred_check_branch
        %155 = sbr.rel (%p153) target = $region32
      $region31: #{basic_conv_forward.1} parent=27 // pred_region
        %p156 = scmp.lt.s32.totalorder %s10, 1
        %s157 = scalar_select %p156, %s10, 1
        %s158 = smul.addr %s157, 2
        %s159 = smul.addr %s158, 4
        %s160 = scalar_lea.vmem %s0, %s159
      $region32: #{basic_conv_forward.1} parent=27 // pred_fallthru
        _
    $region28: #{basic_conv_forward.1} parent=5 // pred_fallthru
      _
    %p161 = scmp.le.s32.totalorder 1, %s10
    %p162 = scmp.lt.s32.totalorder %s10, 3
    %p163 = pnand %p161, %p162
    %p164 = pneg %p163
    // Predicated region
    $region33: #{basic_conv_forward.1} parent=5 // pred_check
      _
    $region34: #{basic_conv_forward.1} parent=5 // pred_check_branch
      %166 = sbr.rel (%p163) target = $region36
    $region35: #{basic_conv_forward.1} parent=5 // pred_region
      %s167 = ssub.s32 %s10, 1
      %p168 = scmp.lt.s32.totalorder %s15, 1
      %s169 = scalar_select %p168, %s15, 1
      %s170 = smul.addr %s169, 2
      %s171 = smul.addr %s170, 4
      %s172 = scalar_lea.vmem %s0, %s171
      %p173 = pneg %p36
      %p174 = pneg %p33
      %p175 = pneg %p57
      %p176 = pneg %p54
      %p177 = pneg %p78
      %p178 = pneg %p75
      %p179 = pneg %p99
      %p180 = pneg %p96
      %p181 = pneg %p125
      %p182 = pneg %p122
      %p183 = scmp.lt.s32.totalorder %s15, 1
      %s184 = scalar_select %p183, %s15, 1
      %s185 = smul.addr %s184, 2
      %s186 = smul.addr %s185, 8
      %s187 = scalar_lea.vmem %s4, %s186
      %p188 = scmp.lt.s32.totalorder %s15, 1
      %s189 = scalar_select %p188, %s15, 1
      %s190 = smul.addr %s189, 2
      %s191 = smul.addr %s190, 4
      %s192 = scalar_lea.vmem %s0, %s191
      %p193 = scmp.lt.s32.totalorder %s15, 1
      %s194 = scalar_select %p193, %s15, 1
      %s195 = smul.addr %s194, 2
      %s196 = smul.addr %s195, 8
      %s197 = scalar_lea.vmem %s4, %s196
      %199 = vst [vmem:[#allocation2] sm:$0xff] 0.0
      %200 = vst [vmem:[#allocation2 + $0x8] sm:$0xff] 0.0
      %201 = vst [vmem:[#allocation2 + $0x10] sm:$0xff] 0.0
      %202 = vst [vmem:[#allocation2 + $0x18] sm:$0xff] 0.0
      %v203 = vld [vmem:[%s192] sm:$0xff]
      %v205 = vcombine.high %v203, %v203
      %207 = vst [vmem:[#allocation2 + $0x8] sm:$0xf] %v203
      %208 = vst [vmem:[#allocation2 + $0x10] sm:$0xf] %v205
      %v209 = vld [vmem:[#allocation2] sm:$0xff]
      %v210 = vld [vmem:[#allocation2 + $0x8] sm:$0xff]
      %v211 = vld [vmem:[#allocation2 + $0x10] sm:$0xff]
      %v212 = vld [vmem:[#allocation2 + $0x8] sm:$0xff]
      %v213 = vld [vmem:[#allocation2 + $0x10] sm:$0xff]
      %v214 = vld [vmem:[#allocation2 + $0x18] sm:$0xff]
      %218 = vrot.lane.b32.xlu0 %v209, 127
      %v219 = vpop.permute.xlu0 %218
      %220 = vrot.lane.b32.xlu0 %v210, 127
      %v221 = vpop.permute.xlu0 %220
      %222 = vrot.lane.b32.xlu0 %v211, 127
      %v223 = vpop.permute.xlu0 %222
      %vm224 = vcmask 1039360
      %v225 = vsel %vm224, %v219, %v221
      %v226 = vsel %vm224, %v221, %v223
      %230 = vrot.lane.b32.xlu0 %v209, 126
      %v231 = vpop.permute.xlu0 %230
      %232 = vrot.lane.b32.xlu0 %v210, 126
      %v233 = vpop.permute.xlu0 %232
      %234 = vrot.lane.b32.xlu0 %v211, 126
      %v235 = vpop.permute.xlu0 %234
      %vm236 = vcmask 1031168
      %v237 = vsel %vm236, %v231, %v233
      %v238 = vsel %vm236, %v233, %v235
      %242 = vrot.lane.b32.xlu0 %v209, 112
      %v243 = vpop.permute.xlu0 %242
      %244 = vrot.lane.b32.xlu0 %v210, 112
      %v245 = vpop.permute.xlu0 %244
      %246 = vrot.lane.b32.xlu0 %v211, 112
      %v247 = vpop.permute.xlu0 %246
      %vm248 = vcmask 916480
      %v249 = vsel %vm248, %v243, %v245
      %v250 = vsel %vm248, %v245, %v247
      %254 = vrot.lane.b32.xlu0 %v210, 111
      %v255 = vpop.permute.xlu0 %254
      %256 = vrot.lane.b32.xlu0 %v211, 111
      %v257 = vpop.permute.xlu0 %256
      %vm258 = vcmask 908288
      %v259 = vsel %vm258, %v255, %v257
      %266 = vrot.lane.b32.xlu0 %v212, 110
      %v267 = vpop.permute.xlu0 %266
      %268 = vrot.lane.b32.xlu0 %v213, 110
      %v269 = vpop.permute.xlu0 %268
      %270 = vrot.lane.b32.xlu0 %v214, 110
      %v271 = vpop.permute.xlu0 %270
      %vm272 = vcmask 900096
      %v273 = vsel %vm272, %v267, %v269
      %v274 = vsel %vm272, %v269, %v271
      %278 = vrot.lane.b32.xlu0 %v212, 96
      %v279 = vpop.permute.xlu0 %278
      %280 = vrot.lane.b32.xlu0 %v213, 96
      %v281 = vpop.permute.xlu0 %280
      %282 = vrot.lane.b32.xlu0 %v214, 96
      %v283 = vpop.permute.xlu0 %282
      %vm284 = vcmask 785408
      %v285 = vsel %vm284, %v279, %v281
      %v286 = vsel %vm284, %v281, %v283
      %290 = vrot.lane.b32.xlu0 %v212, 95
      %v291 = vpop.permute.xlu0 %290
      %292 = vrot.lane.b32.xlu0 %v213, 95
      %v293 = vpop.permute.xlu0 %292
      %294 = vrot.lane.b32.xlu0 %v214, 95
      %v295 = vpop.permute.xlu0 %294
      %vm296 = vcmask 777216
      %v297 = vsel %vm296, %v291, %v293
      %v298 = vsel %vm296, %v293, %v295
      %302 = vrot.lane.b32.xlu0 %v212, 94
      %v303 = vpop.permute.xlu0 %302
      %304 = vrot.lane.b32.xlu0 %v213, 94
      %v305 = vpop.permute.xlu0 %304
      %306 = vrot.lane.b32.xlu0 %v214, 94
      %v307 = vpop.permute.xlu0 %306
      %vm308 = vcmask 769024
      %v309 = vsel %vm308, %v303, %v305
      %v310 = vsel %vm308, %v305, %v307
      %v314 = vld [vmem:[%s2] sm:$0xff]
      %v315 = vld [vmem:[%s2 + $0x8] sm:$0xff]
      %v316 = vld [vmem:[%s2 + $0x10] sm:$0xff]
      %v317 = vld [vmem:[%s2 + $0x18] sm:$0xff]
      %v318 = vld [vmem:[%s2 + $0x20] sm:$0xff]
      %v319 = vld [vmem:[%s2 + $0x28] sm:$0xff]
      %v320 = vld [vmem:[%s2 + $0x30] sm:$0xff]
      %v321 = vld [vmem:[%s2 + $0x38] sm:$0xff]
      %v322 = vld [vmem:[%s2 + $0x40] sm:$0xff]
      %v323 = vld [vmem:[%s2 + $0x48] sm:$0xff]
      %v324 = vld [vmem:[%s2 + $0x50] sm:$0xff]
      %v325 = vld [vmem:[%s2 + $0x58] sm:$0xff]
      %v326 = vld [vmem:[%s2 + $0x60] sm:$0xff]
      %v327 = vld [vmem:[%s2 + $0x68] sm:$0xff]
      %v328 = vld [vmem:[%s2 + $0x70] sm:$0xff]
      %v329 = vld [vmem:[%s2 + $0x78] sm:$0xff]
      %v330 = vld [vmem:[%s2 + $0x80] sm:$0xff]
      %v331 = vld [vmem:[%s2 + $0x88] sm:$0xff]
      %350 = vrot.lane.b32.xlu0 %v314, 111
      %v351 = vpop.permute.xlu0 %350
      %352 = vrot.lane.b32.xlu0 %v315, 111
      %v353 = vpop.permute.xlu0 %352
      %354 = vrot.lane.b32.xlu0 %v316, 111
      %v355 = vpop.permute.xlu0 %354
      %356 = vrot.lane.b32.xlu0 %v317, 111
      %v357 = vpop.permute.xlu0 %356
      %358 = vrot.lane.b32.xlu0 %v318, 111
      %v359 = vpop.permute.xlu0 %358
      %360 = vrot.lane.b32.xlu0 %v319, 111
      %v361 = vpop.permute.xlu0 %360
      %362 = vrot.lane.b32.xlu0 %v320, 111
      %v363 = vpop.permute.xlu0 %362
      %364 = vrot.lane.b32.xlu0 %v321, 111
      %v365 = vpop.permute.xlu0 %364
      %366 = vrot.lane.b32.xlu0 %v322, 111
      %v367 = vpop.permute.xlu0 %366
      %368 = vrot.lane.b32.xlu0 %v323, 111
      %v369 = vpop.permute.xlu0 %368
      %370 = vrot.lane.b32.xlu0 %v324, 111
      %v371 = vpop.permute.xlu0 %370
      %372 = vrot.lane.b32.xlu0 %v325, 111
      %v373 = vpop.permute.xlu0 %372
      %374 = vrot.lane.b32.xlu0 %v326, 111
      %v375 = vpop.permute.xlu0 %374
      %376 = vrot.lane.b32.xlu0 %v327, 111
      %v377 = vpop.permute.xlu0 %376
      %378 = vrot.lane.b32.xlu0 %v328, 111
      %v379 = vpop.permute.xlu0 %378
      %380 = vrot.lane.b32.xlu0 %v329, 111
      %v381 = vpop.permute.xlu0 %380
      %382 = vrot.lane.b32.xlu0 %v330, 111
      %v383 = vpop.permute.xlu0 %382
      %384 = vrot.lane.b32.xlu0 %v331, 111
      %v385 = vpop.permute.xlu0 %384
      %v386 = vsel %vm258, %v351, %v353
      %v387 = vsel %vm258, %v355, %v357
      %v388 = vsel %vm258, %v359, %v361
      %v389 = vsel %vm258, %v363, %v365
      %v390 = vsel %vm258, %v367, %v369
      %v391 = vsel %vm258, %v371, %v373
      %v392 = vsel %vm258, %v375, %v377
      %v393 = vsel %vm258, %v379, %v381
      %v394 = vsel %vm258, %v383, %v385
      %v422 = vmul.f32 %v209, %v351
      %v423 = vmul.f32 %v210, %v386
      %v424 = vmul.f32 %v211, %v353
      %v425 = vmul.f32 %v225, %v355
      %v426 = vmul.f32 %v226, %v387
      %v427 = vmul.f32 %v223, %v357
      %v428 = vmul.f32 %v237, %v359
      %v429 = vmul.f32 %v238, %v388
      %v430 = vmul.f32 %v235, %v361
      %v431 = vmul.f32 %v249, %v363
      %v432 = vmul.f32 %v250, %v389
      %v433 = vmul.f32 %v247, %v365
      %v434 = vmul.f32 %v255, %v367
      %v435 = vmul.f32 %v259, %v390
      %v436 = vmul.f32 %v257, %v369
      %v437 = vmul.f32 %v267, %v371
      %v438 = vmul.f32 %v273, %v391
      %v439 = vmul.f32 %v274, %v373
      %v440 = vmul.f32 %v279, %v375
      %v441 = vmul.f32 %v285, %v392
      %v442 = vmul.f32 %v286, %v377
      %v443 = vmul.f32 %v291, %v379
      %v444 = vmul.f32 %v297, %v393
      %v445 = vmul.f32 %v298, %v381
      %v446 = vmul.f32 %v303, %v383
      %v447 = vmul.f32 %v309, %v394
      %v448 = vmul.f32 %v310, %v385
      %v449 = vpack.c.bf16 %v425, %v422
      %v450 = vpack.c.bf16 %v426, %v423
      %v451 = vpack.c.bf16 %v427, %v424
      %v452 = vpack.c.bf16 %v431, %v428
      %v453 = vpack.c.bf16 %v432, %v429
      %v454 = vpack.c.bf16 %v433, %v430
      %v455 = vpack.c.bf16 %v437, %v434
      %v456 = vpack.c.bf16 %v438, %v435
      %v457 = vpack.c.bf16 %v439, %v436
      %v458 = vpack.c.bf16 %v443, %v440
      %v459 = vpack.c.bf16 %v444, %v441
      %v460 = vpack.c.bf16 %v445, %v442
      %v461 = vpack.c.bf16 %v446, %v446
      %v462 = vpack.c.bf16 %v447, %v447
      %v463 = vpack.c.bf16 %v448, %v448
      %v464 = vld [vmem:[%s1] sm:$0xf]
      %v465 = vld [vmem:[%s3] sm:$0xff]
      %467 = vset.pattern.permute.xlu0 0
      %468 = vperm.xlu0 %467, %v465
      %v469 = vpop.permute.xlu0 %468
      %486 = vrot.lane.b32.xlu0 %v449, 17
      %v487 = vpop.permute.xlu0 %486
      %488 = vrot.lane.b32.xlu0 %v450, 17
      %v489 = vpop.permute.xlu0 %488
      %490 = vrot.lane.b32.xlu0 %v451, 17
      %v491 = vpop.permute.xlu0 %490
      %492 = vrot.lane.b32.xlu0 %v452, 17
      %v493 = vpop.permute.xlu0 %492
      %494 = vrot.lane.b32.xlu0 %v453, 17
      %v495 = vpop.permute.xlu0 %494
      %496 = vrot.lane.b32.xlu0 %v454, 17
      %v497 = vpop.permute.xlu0 %496
      %498 = vrot.lane.b32.xlu0 %v455, 17
      %v499 = vpop.permute.xlu0 %498
      %500 = vrot.lane.b32.xlu0 %v456, 17
      %v501 = vpop.permute.xlu0 %500
      %502 = vrot.lane.b32.xlu0 %v457, 17
      %v503 = vpop.permute.xlu0 %502
      %504 = vrot.lane.b32.xlu0 %v458, 17
      %v505 = vpop.permute.xlu0 %504
      %506 = vrot.lane.b32.xlu0 %v459, 17
      %v507 = vpop.permute.xlu0 %506
      %508 = vrot.lane.b32.xlu0 %v460, 17
      %v509 = vpop.permute.xlu0 %508
      %510 = vrot.lane.b32.xlu0 %v461, 17
      %v511 = vpop.permute.xlu0 %510
      %512 = vrot.lane.b32.xlu0 %v462, 17
      %v513 = vpop.permute.xlu0 %512
      %514 = vrot.lane.b32.xlu0 %v463, 17
      %v515 = vpop.permute.xlu0 %514
      %vm516 = vcmask 138240
      %v517 = vsel %vm516, %v487, %v489
      %v518 = vsel %vm516, %v489, %v491
      %v519 = vsel %vm516, %v493, %v495
      %v520 = vsel %vm516, %v495, %v497
      %v521 = vsel %vm516, %v499, %v501
      %v522 = vsel %vm516, %v501, %v503
      %v523 = vsel %vm516, %v505, %v507
      %v524 = vsel %vm516, %v507, %v509
      %v525 = vsel %vm516, %v511, %v513
      %v526 = vsel %vm516, %v513, %v515
      %vm535 = vcmask 588800
      %v537 = vsel %vm535, %v464, 0
      %vm539 = vcmask 1043456
      %v541 = vsel %vm539, %v525, 0
      %v544 = vsel %vm539, %v526, 0
      %546 = vmatprep.subr.bf16.mxu0 0
      %547 = vmatpush1.bf16.msra.mxu0 0
      %548 = vmatprep.subr.bf16.mxu0 0
      %549 = vmatpush1.bf16.msra.mxu0 0
      %550 = vmatprep.subr.bf16.mxu0 0
      %551 = vmatpush1.bf16.msra.mxu0 0
      %552 = vmatprep.subr.bf16.mxu0 %v544
      %553 = vmatpush1.bf16.msra.mxu0 %v541
      %554 = vmatprep.subr.bf16.mxu0 %v524
      %555 = vmatpush1.bf16.msra.mxu0 %v523
      %556 = vmatprep.subr.bf16.mxu0 %v522
      %557 = vmatpush1.bf16.msra.mxu0 %v521
      %558 = vmatprep.subr.bf16.mxu0 %v520
      %559 = vmatpush1.bf16.msra.mxu0 %v519
      %560 = vmatprep.subr.bf16.mxu0 %v518
      %561 = vmatpush1.bf16.msra.mxu0 %v517
      %562 = vmatprep.subr.bf16.mxu0 0
      %563 = vmatpush2.bf16.msra.mxu0 0
      %564 = vmatprep.subr.bf16.mxu0 0
      %565 = vmatpush2.bf16.msra.mxu0 0
      %566 = vmatprep.subr.bf16.mxu0 0
      %567 = vmatpush2.bf16.msra.mxu0 0
      %568 = vmatprep.subr.bf16.mxu0 0
      %569 = vmatpush2.bf16.msra.mxu0 0
      %570 = vmatprep.subr.bf16.mxu0 0
      %571 = vmatpush2.bf16.msra.mxu0 0
      %572 = vmatprep.subr.bf16.mxu0 0
      %573 = vmatpush2.bf16.msra.mxu0 0
      %574 = vmatprep.subr.bf16.mxu0 0
      %575 = vmatpush2.bf16.msra.mxu0 0
      %576 = vmatprep.subr.bf16.mxu0 0
      %577 = vmatpush2.bf16.msra.mxu0 0
      %578 = vmatprep.mubr.bf16.mxu0 0
      %579 = vmatmul.mubr.bf16.gmra.mxu0 %v537
      %v580 = vpop.f32.mrf.mxu0
      %v581 = vadd.f32 %v469, %v580
      %v582 = vpop.f32.mrf.mxu0
      %v583 = vadd.f32 %v469, %v582
      %v584 = vpop.f32.mrf.mxu0
      %v585 = vpop.f32.mrf.mxu0
      %586 = vdwg.mxu0
      %v587 = vmax.f32 %v581, 0.0
      %v588 = vmax.f32 %v583, 0.0
      %589 = vst [vmem:[%s197] sm:$0xff] %v587
      %590 = vst [vmem:[%s197 + $0x8] sm:$0xff] %v588
      %p591 = scmp.lt.s32.totalorder %s15, 1
      %s592 = scalar_select %p591, %s15, 1
      %s593 = smul.addr %s592, 2
      %s594 = smul.addr %s593, 8
      %s595 = scalar_lea.vmem %s4, %s594
      // Predicated region
      $region37: #{basic_conv_forward.1} parent=35 // pred_check
        %p596 = pneg %p122
      $region38: #{basic_conv_forward.1} parent=35 // pred_check_branch
        %598 = sbr.rel (%p596) target = $region40
      $region39: #{basic_conv_forward.1} parent=35 // pred_region
        _
      $region40: #{basic_conv_forward.1} parent=35 // pred_fallthru
        _
    $region36: #{basic_conv_forward.1} parent=5 // pred_fallthru
      _
    %p599 = scmp.le.s32.totalorder 2, %s10
    // Predicated region
    $region41: #{basic_conv_forward.1} parent=5 // pred_check
      %p600 = pneg %p599
    $region42: #{basic_conv_forward.1} parent=5 // pred_check_branch
      %602 = sbr.rel (%p600) target = $region44
    $region43: #{basic_conv_forward.1} parent=5 // pred_region
      %s603 = ssub.s32 %s10, 2
      // Predicated region
      $region45: #{basic_conv_forward.1} parent=43 // pred_check
        %p604 = pneg %p128
      $region46: #{basic_conv_forward.1} parent=43 // pred_check_branch
        %606 = sbr.rel (%p604) target = $region48
      $region47: #{basic_conv_forward.1} parent=43 // pred_region
        %p607 = scmp.lt.s32.totalorder %s16, 1
        %s608 = scalar_select %p607, %s16, 1
        %s609 = smul.addr %s608, 2
        %s610 = smul.addr %s609, 8
        %s611 = scalar_lea.vmem %s4, %s610
      $region48: #{basic_conv_forward.1} parent=43 // pred_fallthru
        _
    $region44: #{basic_conv_forward.1} parent=5 // pred_fallthru
      _
  $region6: #{basic_conv_forward.1} parent=0 // loop_footer
    %s14 = sadd.s32 1, %s10
  $region7: #{basic_conv_forward.1} parent=0 // loop_footer_branch
    %9 = sbr.rel target = $region3
  $region8: #{basic_conv_forward.1} parent=0 // loop_exit
    _

</llo_original>
